<compile_context>
chip_gen: v6e
topology: v6e:2x2x1
jax: 0.10.0
libtpu: 0.0.40
codegen_flags: <defaults>
</compile_context>

<pallas_src>
import math

import jax
import jax.numpy as jnp
from jax.experimental import pallas as pl
from jax.experimental.pallas import tpu as pltpu

_C1 = math.sqrt(2.0 / math.pi)
_C2 = _C1 * 0.044715


def _gelu_kernel(x_ref, o_ref):
    # f32 internal math regardless of I/O dtype (VPU/EUP have huge slack).
    x = x_ref[...].astype(jnp.float32)
    x2 = x * x
    inner = x * (_C1 + _C2 * x2)          # = sqrt(2/pi) * (x + 0.044715*x^3)
    h = 0.5 * x
    o_ref[...] = (h + h * jnp.tanh(inner)).astype(o_ref.dtype)


def _tile_params():
    """(target_block_bytes, vmem_limit_bytes) sized per chip generation."""
    try:
        vmem_bytes = int(pltpu.get_tpu_info().vmem_capacity_bytes)
    except Exception:
        vmem_bytes = 64 << 20
    if vmem_bytes >= (96 << 20):
        # v5e / v6e: 128 MiB physical VMEM -> big tiles, raised scoped limit.
        return 6 << 20, 64 << 20
    # v7x: 64 MiB physical VMEM -> slightly smaller tiles, 40 MiB limit.
    return 4 << 20, 40 << 20


def gelu(x: jax.Array) -> jax.Array:
    """Elementwise tanh-GeLU via Pallas.  Accepts any shape / float dtype."""
    orig_shape = x.shape
    dtype = x.dtype
    n = x.size
    if n == 0:
        return x
    itemsize = jnp.dtype(dtype).itemsize
    granule = max(8, 32 // itemsize)  # dtype-native sublane granule

    target_block_bytes, vmem_limit = _tile_params()

    # Lane-dense layout.  Fast path: pick the largest of (1024..128) lanes
    # that divides n exactly -> pure reshape, no pad, no output slice.
    lanes = None
    for cand in (1024, 512, 256, 128):
        if n % cand == 0:
            lanes = cand
            break
    if lanes is not None:
        rows = n // lanes
        pad = 0
    else:
        lanes = 1024 if n >= 1024 else 128
        rows = pl.cdiv(n, lanes)
        pad = rows * lanes - n

    x_flat = jnp.ravel(x)
    if pad:
        # Rare (non-128-divisible) path: minimal zero pad; GeLU(0)=0 and the
        # padded tail is sliced off below.
        x_flat = jnp.pad(x_flat, (0, pad))
    x2d = x_flat.reshape(rows, lanes)

    # Block rows: aim for ~target_block_bytes per tile, sublane-granule sized.
    block_rows = max(
        granule, (target_block_bytes // (lanes * itemsize)) // granule * granule
    )
    if rows <= block_rows:
        # Small array: a single full-extent block (always a legal block shape;
        # splitting would only add per-step overhead on single-TC chips).
        block_rows = rows
        num_blocks = 1
    else:
        num_blocks = pl.cdiv(rows, block_rows)
        if 2 <= num_blocks <= 16 and num_blocks % 2 == 1:
            # Small odd block count -> imbalanced across v7x's 2 TCs; nudge
            # the split even (harmless on single-TC chips).
            target_nb = num_blocks + 1
            block_rows = max(
                granule, pl.cdiv(pl.cdiv(rows, target_nb), granule) * granule
            )
            num_blocks = pl.cdiv(rows, block_rows)

    out2d = pl.pallas_call(
        _gelu_kernel,
        out_shape=jax.ShapeDtypeStruct((rows, lanes), dtype),
        grid_spec=pltpu.PrefetchScalarGridSpec(
            num_scalar_prefetch=0,
            grid=(num_blocks,),
            in_specs=[pl.BlockSpec((block_rows, lanes), lambda i: (i, 0))],
            out_specs=pl.BlockSpec((block_rows, lanes), lambda i: (i, 0)),
        ),
        compiler_params=pltpu.CompilerParams(
            dimension_semantics=("parallel",),
            vmem_limit_bytes=vmem_limit,
        ),
        cost_estimate=pl.CostEstimate(
            flops=8 * n,
            transcendentals=n,
            bytes_accessed=2 * n * itemsize,
        ),
    )(x2d)

    if pad:
        out_flat = out2d.reshape(-1)[:n]
        return out_flat.reshape(orig_shape)
    return out2d.reshape(orig_shape)


def gelu_reference(x: jax.Array) -> jax.Array:
    xf = x.astype(jnp.float32)
    y = 0.5 * xf * (1.0 + jnp.tanh(_C1 * (xf + 0.044715 * jnp.power(xf, 3))))
    return y.astype(x.dtype)


if __name__ == "__main__":
    key = jax.random.PRNGKey(0)

    # Transformer-like activation, last dim a multiple of 128 (fast path).
    x = jax.random.normal(key, (2, 8, 256), dtype=jnp.float32)
    out = jax.block_until_ready(gelu(x))
    ref = gelu_reference(x)
    assert out.shape == ref.shape and out.dtype == ref.dtype
    assert jnp.allclose(out, ref, atol=1e-5, rtol=1e-5), "f32 mismatch vs reference"

    # Non-divisible / odd shape (exercises the padded tail path).
    x_odd = jax.random.normal(jax.random.PRNGKey(1), (3, 7, 33), dtype=jnp.float32)
    out_odd = jax.block_until_ready(gelu(x_odd))
    ref_odd = gelu_reference(x_odd)
    assert jnp.allclose(out_odd, ref_odd, atol=1e-5, rtol=1e-5), "odd-shape mismatch"

    # bf16 I/O (internal math is f32; 16-row sublane granule path).
    x_bf16 = jax.random.normal(jax.random.PRNGKey(2), (8, 512)).astype(jnp.bfloat16)
    out_bf16 = jax.block_until_ready(gelu(x_bf16))
    ref_bf16 = gelu_reference(x_bf16)
    assert out_bf16.dtype == jnp.bfloat16
    assert jnp.allclose(
        out_bf16.astype(jnp.float32), ref_bf16.astype(jnp.float32),
        atol=2e-2, rtol=2e-2,
    ), "bf16 mismatch vs reference"

    print("KERNEL_OK")
</pallas_src>

<mosaic_0001>
module attributes {stable_mosaic.version = 11 : i64} {
  func.func @_gelu_kernel(%arg0: i32, %arg1: memref<4x1024xf32, #tpu.memory_space<vmem>>, %arg2: memref<4x1024xf32, #tpu.memory_space<vmem>>) attributes {dimension_semantics = [#tpu.dimension_semantics<parallel>], iteration_bounds = array<i64: 1>, scalar_prefetch = 0 : i64, scratch_operands = 0 : i64, tpu.core_type = #tpu.core_type<tc>, window_params = [{transform_indices = @transform_0, window_bounds = array<i64: 4, 1024>}, {transform_indices = @transform_1, window_bounds = array<i64: 4, 1024>}]} {
    %c0 = arith.constant 0 : index
    %c0_0 = arith.constant 0 : index
    %0 = vector.load %arg1[%c0, %c0_0] : memref<4x1024xf32, #tpu.memory_space<vmem>>, vector<4x1024xf32>
    %1 = arith.mulf %0, %0 : vector<4x1024xf32>
    %cst = arith.constant 0.0356774069 : f32
    %2 = vector.broadcast %cst : f32 to vector<4x1024xf32>
    %3 = arith.mulf %2, %1 : vector<4x1024xf32>
    %cst_1 = arith.constant 0.797884583 : f32
    %4 = vector.broadcast %cst_1 : f32 to vector<4x1024xf32>
    %5 = arith.addf %4, %3 : vector<4x1024xf32>
    %6 = arith.mulf %0, %5 : vector<4x1024xf32>
    %cst_2 = arith.constant 5.000000e-01 : f32
    %7 = vector.broadcast %cst_2 : f32 to vector<4x1024xf32>
    %8 = arith.mulf %7, %0 : vector<4x1024xf32>
    %9 = math.tanh %6 : vector<4x1024xf32>
    %10 = arith.mulf %8, %9 : vector<4x1024xf32>
    %11 = arith.addf %8, %10 : vector<4x1024xf32>
    %c0_3 = arith.constant 0 : index
    %c0_4 = arith.constant 0 : index
    %12 = vector.load %arg2[%c0_3, %c0_4] : memref<4x1024xf32, #tpu.memory_space<vmem>>, vector<4x1024xf32>
    tpu.vector_store %arg2[%c0_3, %c0_4], %11 {strides = array<i32>} : memref<4x1024xf32, #tpu.memory_space<vmem>>, vector<4x1024xf32>,
    return
  }
  func.func @transform_0(%arg0: i32) -> (i32, i32) {
    %c0_i32 = arith.constant 0 : i32
    %c0_i32_0 = arith.constant 0 : i32
    return %arg0, %c0_i32 : i32, i32
  }
  func.func @transform_1(%arg0: i32) -> (i32, i32) {
    %c0_i32 = arith.constant 0 : i32
    %c0_i32_0 = arith.constant 0 : i32
    return %arg0, %c0_i32 : i32, i32
  }
}

</mosaic_0001>

<llo_original>
// kernel: tpu_custom_call.1
$region0: #{tpu_custom_call.1}
  #allocation0 [shape = 'u32[]', space=smem, size = 0x4, offset = 0x4, fixed_abs, tag = 'smem constant byte address 0x4 - core index']
  #allocation1 [shape = 'u32[144,128]{1,0:T(1,128)}', space=vmem, size = 0x12000, scoped, tag = 'internal scratch']
  %s0 = inlined_call_operand.hbm [shape: f32[4,1024], index: 0, kind: input, shape index: {}]
  %s1 = inlined_call_operand.hbm [shape: f32[4,1024], index: 1, kind: output, shape index: {}]
  %s2 = sld [smem:[#allocation0]]
  $region18: #{tpu_custom_call.1} parent=0
    _
  %s4 = ssub.s32 1, %s2
  %s5 = scalar_select 0, %s4, %s2
  $region1: #{tpu_custom_call.1} parent=0
    #allocation2 [shape = 'u8[16384]{0}', space=vmem, size = 0x4000, scoped, tag = 'input window, operand 0, single buffered']
    #allocation3 [shape = 's32[1]{0}', space=sflag, size = 0x4, scoped, tag = 'scoped memory for tpu_custom_call.1']
    #allocation4 [shape = 's32[1]{0}', space=sflag, size = 0x4, scoped, tag = 'scoped memory for tpu_custom_call.1']
    #allocation5 [shape = 'u8[16384]{0}', space=vmem, size = 0x4000, scoped, tag = 'output window, operand 0, single buffered']
    %6 = vsyncpa [#allocation3], 0
    %7 = vsyncpa [#allocation4], 0
    // Predicated region
    $region2: #{tpu_custom_call.1} parent=1 // pred_check
      _
    $region3: #{tpu_custom_call.1} parent=1 // pred_check_branch
      %9 = sbr.rel (0) target = $region5
    $region4: #{tpu_custom_call.1} parent=1 // pred_region
      %s11 = ssub.s32 512, 512
      %12 = vsyncadd [#allocation3], %s11
      %s14 = sshll.u32 [#allocation2], 4
      %s15 = int_to_ptr.vmem [resolvable:$true] %s14
      %17 = dma.hbm_to_vmem [thread:$0]  %s0, 512, %s15, [#allocation3]
    $region5: #{tpu_custom_call.1} parent=1 // pred_fallthru
      _
    // Predicated region
    $region6: #{tpu_custom_call.1} parent=1 // pred_check
      _
    $region7: #{tpu_custom_call.1} parent=1 // pred_check_branch
      %19 = sbr.rel (0) target = $region9
    $region8: #{tpu_custom_call.1} parent=1 // pred_region
      %20 = dma.done [#allocation3], 512
    $region9: #{tpu_custom_call.1} parent=1 // pred_fallthru
      _
    %v21 = vld [vmem:[#allocation2] sm:$0xff]
    %v22 = vld [vmem:[#allocation2 + $0x8] sm:$0xff]
    %v23 = vld [vmem:[#allocation2 + $0x10] sm:$0xff]
    %v24 = vld [vmem:[#allocation2 + $0x18] sm:$0xff]
    %v25 = vmul.f32 %v21, %v21
    %v26 = vmul.f32 %v22, %v22
    %v27 = vmul.f32 %v23, %v23
    %v28 = vmul.f32 %v24, %v24
    %v29 = vmul.f32 %v25, 0.035677407
    %v30 = vmul.f32 %v26, 0.035677407
    %v31 = vmul.f32 %v27, 0.035677407
    %v32 = vmul.f32 %v28, 0.035677407
    %v33 = vadd.f32 %v29, 0.7978846
    %v34 = vadd.f32 %v30, 0.7978846
    %v35 = vadd.f32 %v31, 0.7978846
    %v36 = vadd.f32 %v32, 0.7978846
    %v37 = vmul.f32 %v21, %v33
    %v38 = vmul.f32 %v22, %v34
    %v39 = vmul.f32 %v23, %v35
    %v40 = vmul.f32 %v24, %v36
    %v41 = vmul.f32 %v21, 0.5
    %v42 = vmul.f32 %v22, 0.5
    %v43 = vmul.f32 %v23, 0.5
    %v44 = vmul.f32 %v24, 0.5
    %v45 = vtanh.pop %v37
    %v46 = vtanh.pop %v38
    %v47 = vtanh.pop %v39
    %v48 = vtanh.pop %v40
    %v49 = vmul.f32 %v41, %v45
    %v50 = vmul.f32 %v42, %v46
    %v51 = vmul.f32 %v43, %v47
    %v52 = vmul.f32 %v44, %v48
    %v53 = vadd.f32 %v41, %v49
    %v54 = vadd.f32 %v42, %v50
    %v55 = vadd.f32 %v43, %v51
    %v56 = vadd.f32 %v44, %v52
    %57 = vst [vmem:[#allocation5] sm:$0xff] %v53
    %58 = vst [vmem:[#allocation5 + $0x8] sm:$0xff] %v54
    %59 = vst [vmem:[#allocation5 + $0x10] sm:$0xff] %v55
    %60 = vst [vmem:[#allocation5 + $0x18] sm:$0xff] %v56
    // Predicated region
    $region10: #{tpu_custom_call.1} parent=1 // pred_check
      _
    $region11: #{tpu_custom_call.1} parent=1 // pred_check_branch
      %62 = sbr.rel (0) target = $region13
    $region12: #{tpu_custom_call.1} parent=1 // pred_region
      %s64 = ssub.s32 512, 512
      %65 = vsyncadd [#allocation4], %s64
      %s67 = sshll.u32 [#allocation5], 4
      %s68 = int_to_ptr.vmem [resolvable:$true] %s67
      %70 = dma.vmem_to_hbm [thread:$0]  %s68, 512, %s1, [#allocation4]
    $region13: #{tpu_custom_call.1} parent=1 // pred_fallthru
      _
    // Predicated region
    $region14: #{tpu_custom_call.1} parent=1 // pred_check
      _
    $region15: #{tpu_custom_call.1} parent=1 // pred_check_branch
      %72 = sbr.rel (0) target = $region17
    $region16: #{tpu_custom_call.1} parent=1 // pred_region
      %73 = dma.done [#allocation4], 512
    $region17: #{tpu_custom_call.1} parent=1 // pred_fallthru
      _
    %74 = vsyncpa [#allocation3], 1
    %75 = vsyncpa [#allocation4], 1

</llo_original>
